<compile_context>
chip_gen: v7x
topology: tpu7x:2x2x1
jax: 0.10.0
libtpu: 0.0.40
codegen_flags: <defaults>
</compile_context>

<pallas_src>
import functools

import jax
import jax.numpy as jnp
from jax.experimental import pallas as pl
from jax.experimental.pallas import tpu as pltpu


def _round_up(n, m):
    return ((n + m - 1) // m) * m


def _tile_batch(batch, tb_max):
    """Balanced batch tiling: tb multiple of 8, minimal padding."""
    b8 = _round_up(batch, 8)
    n_tiles = max(1, -(-b8 // tb_max))
    tb = _round_up(-(-batch // n_tiles), 8)
    return tb, n_tiles * tb, n_tiles


def _fused_cost_kernel(x_ref, u_ref, mx_ref, mu_ref, out_ref, *, dx, dz):
    """One batch tile of the running (non-terminal) cost.

    x_ref:   (TB, Dx)   states                      (f32)
    u_ref:   (TB, Du)   actions                     (f32)
    mx_ref:  (Dx, Np)   [Qs | 0]                    (f32, Np multiple of 128)
    mu_ref:  (Du, Np)   [0 | Rs | 0] (cols Dx:Dz)   (f32)
    out_ref: (TB, Np)   cols [0:Dx)=lx, [Dx:Dz)=la, col Dz = l, rest 0
    """
    x = x_ref[...]
    u = u_ref[...]
    # Two MXU passes into the same lane-dense slab (padded cols are zero).
    gx = jnp.dot(x, mx_ref[...], preferred_element_type=jnp.float32)
    gu = jnp.dot(u, mu_ref[...], preferred_element_type=jnp.float32)

    # Quadratic form per row (VPU mul + XLU lane reduce).
    l = 0.5 * (jnp.sum(x * gx[:, :dx], axis=-1, keepdims=True)
               + jnp.sum(u * gu[:, dx:dz], axis=-1, keepdims=True))

    # Fold the scalar cost into lane `dz` (guaranteed zero in gx+gu) and do a
    # single unmasked 128-wide store.
    lane = jax.lax.broadcasted_iota(jnp.int32, gx.shape, dimension=1)
    out_ref[...] = gx + gu + jnp.where(lane == dz, l, 0.0)


def _terminal_cost_kernel(x_ref, mx_ref, out_ref, *, dx):
    """Terminal step: state-only cost (no action-side work)."""
    x = x_ref[...]
    gx = jnp.dot(x, mx_ref[...], preferred_element_type=jnp.float32)
    l = 0.5 * jnp.sum(x * gx[:, :dx], axis=-1, keepdims=True)
    lane = jax.lax.broadcasted_iota(jnp.int32, gx.shape, dimension=1)
    out_ref[...] = gx + jnp.where(lane == dx, l, 0.0)


def fused_quadratic_cost(x, u, m_x, m_u, *, tb_max=1024):
    """Running cost over a 1-D parallel batch grid.

    x: (B, Dx), u: (B, Du), m_x: (Dx, Np), m_u: (Du, Np); Np % 128 == 0.
    Returns (B, Np) f32 slab; caller slices lx / la / l columns.
    """
    B, dx = x.shape
    du = u.shape[1]
    dz = dx + du
    Np = m_x.shape[1]

    tb, b_pad, n_tiles = _tile_batch(B, tb_max)
    if b_pad != B:
        pad = ((0, b_pad - B), (0, 0))
        x = jnp.pad(x, pad)
        u = jnp.pad(u, pad)

    out = pl.pallas_call(
        functools.partial(_fused_cost_kernel, dx=dx, dz=dz),
        out_shape=jax.ShapeDtypeStruct((b_pad, Np), jnp.float32),
        grid_spec=pltpu.PrefetchScalarGridSpec(
            num_scalar_prefetch=0,
            grid=(n_tiles,),
            in_specs=[
                pl.BlockSpec((tb, dx), lambda i: (i, 0)),
                pl.BlockSpec((tb, du), lambda i: (i, 0)),
                # Constant index_map: parameters DMA'd once, VMEM-resident.
                pl.BlockSpec((dx, Np), lambda i: (0, 0)),
                pl.BlockSpec((du, Np), lambda i: (0, 0)),
            ],
            out_specs=pl.BlockSpec((tb, Np), lambda i: (i, 0)),
        ),
        compiler_params=pltpu.CompilerParams(
            dimension_semantics=("parallel",),
        ),
    )(x, u, m_x, m_u)
    return out[:B]


def terminal_quadratic_cost(x, m_x, *, tb_max=1024):
    """Terminal (state-only) cost. Returns (B, Np) slab: [lx | l | 0]."""
    B, dx = x.shape
    Np = m_x.shape[1]

    tb, b_pad, n_tiles = _tile_batch(B, tb_max)
    if b_pad != B:
        x = jnp.pad(x, ((0, b_pad - B), (0, 0)))

    out = pl.pallas_call(
        functools.partial(_terminal_cost_kernel, dx=dx),
        out_shape=jax.ShapeDtypeStruct((b_pad, Np), jnp.float32),
        grid_spec=pltpu.PrefetchScalarGridSpec(
            num_scalar_prefetch=0,
            grid=(n_tiles,),
            in_specs=[
                pl.BlockSpec((tb, dx), lambda i: (i, 0)),
                pl.BlockSpec((dx, Np), lambda i: (0, 0)),
            ],
            out_specs=pl.BlockSpec((tb, Np), lambda i: (i, 0)),
        ),
        compiler_params=pltpu.CompilerParams(
            dimension_semantics=("parallel",),
        ),
    )(x, m_x)
    return out[:B]


class CostPallas:
    """Mirrors the structure of the PyTorch `Cost` base class."""

    def __init__(self, dim_x, dim_u):
        self.dim_x = dim_x
        self.dim_u = dim_u

        # Deterministic PSD parameter matrices (no checkpoint load).
        qd = 1.0 + 0.1 * jnp.arange(dim_x, dtype=jnp.float32)
        rd = 0.5 + 0.05 * jnp.arange(dim_u, dtype=jnp.float32)
        self.Q = jnp.diag(qd)
        self.R = jnp.diag(rd)

        # Symmetrize so lx = Qs x / la = Rs u is the exact gradient even if a
        # subclass supplies a non-symmetric Q/R (cost value is unchanged).
        self.Q_sym = 0.5 * (self.Q + self.Q.T)
        self.R_sym = 0.5 * (self.R + self.R.T)

        # Zero-padded, lane-dense parameter slabs (built once; kept
        # VMEM-resident across grid steps by the constant index_map).
        dz = dim_x + dim_u
        np_full = _round_up(dz + 1, 128)          # +1 lane for the scalar cost
        self._M_x = (jnp.zeros((dim_x, np_full), jnp.float32)
                     .at[:, :dim_x].set(self.Q_sym))
        self._M_u = (jnp.zeros((dim_u, np_full), jnp.float32)
                     .at[:, dim_x:dz].set(self.R_sym))

        np_term = _round_up(dim_x + 1, 128)
        self._M_term = (jnp.zeros((dim_x, np_term), jnp.float32)
                        .at[:, :dim_x].set(self.Q_sym))

    def actor(self, x, a):
        # TODO(synk): abstract in the base class; identity policy-on-action.
        return a

    def forward(self, x, u, t, terminal):
        if terminal:
            out = terminal_quadratic_cost(x, self._M_term)
            dz = self.dim_x
            la = None
        else:
            out = fused_quadratic_cost(x, u, self._M_x, self._M_u)
            dz = self.dim_x + self.dim_u
            la = out[:, self.dim_x:dz]                 # (B, Du)
        l_val = out[:, dz:dz + 1]                      # (B, 1)
        lx = out[:, :self.dim_x]                       # (B, Dx)
        return l_val, lx, la

    def l(self, x, a, t=0, terminal=False, diff=False):
        # `Cost.l` unsqueeze semantics for 1-D inputs.
        if x.ndim == 1:
            x = x[None, :]
        if a.ndim == 1:
            a = a[None, :]
        u = self.actor(x, a)
        l_val, lx, la = self.forward(x, u, t, terminal)

        out = {"l": l_val}
        if diff:
            out["lx"] = lx
            # Constant Hessians returned unbatched (consumers broadcast
            # lazily); avoids B*(Dx^2 + Du^2 + Du*Dx) redundant HBM writes.
            out["lxx"] = self.Q_sym
            if not terminal:
                out["la"] = la
                out["lax"] = jnp.zeros((self.dim_u, self.dim_x), jnp.float32)
                out["laa"] = self.R_sym
        return out


if __name__ == "__main__":
    Dx, Du = 32, 8
    cost = CostPallas(Dx, Du)
    Qs, Rs = cost.Q_sym, cost.R_sym

    key = jax.random.PRNGKey(0)
    kx, ka = jax.random.split(key)

    # --- small non-terminal case, with derivatives --------------------------
    B = 8
    x = jax.random.normal(kx, (B, Dx), dtype=jnp.float32)
    a = jax.random.normal(ka, (B, Du), dtype=jnp.float32)

    out = cost.l(x, a, t=0, terminal=False, diff=True)
    jax.block_until_ready(out)

    ref_l = (0.5 * jnp.sum(x * (x @ Qs), axis=-1, keepdims=True)
             + 0.5 * jnp.sum(a * (a @ Rs), axis=-1, keepdims=True))
    assert jnp.allclose(out["l"], ref_l, atol=1e-5, rtol=1e-5)
    assert jnp.allclose(out["lx"], x @ Qs, atol=1e-5, rtol=1e-5)
    assert jnp.allclose(out["la"], a @ Rs, atol=1e-5, rtol=1e-5)

    # --- terminal step: state-only cost, no action derivatives --------------
    out_t = cost.l(x, a, t=0, terminal=True, diff=True)
    jax.block_until_ready(out_t)
    ref_lt = 0.5 * jnp.sum(x * (x @ Qs), axis=-1, keepdims=True)
    assert jnp.allclose(out_t["l"], ref_lt, atol=1e-5, rtol=1e-5)
    assert jnp.allclose(out_t["lx"], x @ Qs, atol=1e-5, rtol=1e-5)
    assert "la" not in out_t and "laa" not in out_t

    # --- 1-D input unsqueeze path --------------------------------------------
    out_1d = cost.l(x[0], a[0])
    jax.block_until_ready(out_1d)
    assert out_1d["l"].shape == (1, 1)
    assert jnp.allclose(out_1d["l"], ref_l[:1], atol=1e-5, rtol=1e-5)

    # --- multi-tile grid + batch-padding path (horizon folded into batch) ----
    B2 = 20  # small, but with tb_max=8 exercises a 3-step parallel grid + pad
    x2 = jax.random.normal(kx, (B2, Dx), dtype=jnp.float32)
    a2 = jax.random.normal(ka, (B2, Du), dtype=jnp.float32)
    slab = fused_quadratic_cost(x2, a2, cost._M_x, cost._M_u, tb_max=8)
    jax.block_until_ready(slab)
    ref_l2 = (0.5 * jnp.sum(x2 * (x2 @ Qs), axis=-1, keepdims=True)
              + 0.5 * jnp.sum(a2 * (a2 @ Rs), axis=-1, keepdims=True))
    assert jnp.allclose(slab[:, :Dx], x2 @ Qs, atol=1e-5, rtol=1e-5)
    assert jnp.allclose(slab[:, Dx:Dx + Du], a2 @ Rs, atol=1e-5, rtol=1e-5)
    assert jnp.allclose(slab[:, Dx + Du:Dx + Du + 1], ref_l2,
                        atol=1e-5, rtol=1e-5)

    print("KERNEL_OK")
</pallas_src>

<mosaic_0001>
module attributes {stable_mosaic.version = 11 : i64} {
  func.func @_fused_cost_kernel(%arg0: i32, %arg1: memref<8x32xf32, #tpu.memory_space<vmem>>, %arg2: memref<8x8xf32, #tpu.memory_space<vmem>>, %arg3: memref<32x128xf32, #tpu.memory_space<vmem>>, %arg4: memref<8x128xf32, #tpu.memory_space<vmem>>, %arg5: memref<8x128xf32, #tpu.memory_space<vmem>>) attributes {dimension_semantics = [#tpu.dimension_semantics<parallel>], iteration_bounds = array<i64: 1>, scalar_prefetch = 0 : i64, scratch_operands = 0 : i64, tpu.core_type = #tpu.core_type<tc>, window_params = [{transform_indices = @transform_0, window_bounds = array<i64: 8, 32>}, {transform_indices = @transform_1, window_bounds = array<i64: 8, 8>}, {pipeline_mode = #tpu.pipeline_mode<synchronous>, transform_indices = @transform_2, window_bounds = array<i64: 32, 128>}, {pipeline_mode = #tpu.pipeline_mode<synchronous>, transform_indices = @transform_3, window_bounds = array<i64: 8, 128>}, {transform_indices = @transform_4, window_bounds = array<i64: 8, 128>}]} {
    %c0 = arith.constant 0 : index
    %c0_0 = arith.constant 0 : index
    %0 = vector.load %arg1[%c0, %c0_0] : memref<8x32xf32, #tpu.memory_space<vmem>>, vector<8x32xf32>
    %c0_1 = arith.constant 0 : index
    %c0_2 = arith.constant 0 : index
    %1 = vector.load %arg2[%c0_1, %c0_2] : memref<8x8xf32, #tpu.memory_space<vmem>>, vector<8x8xf32>
    %c0_3 = arith.constant 0 : index
    %c0_4 = arith.constant 0 : index
    %2 = vector.load %arg3[%c0_3, %c0_4] : memref<32x128xf32, #tpu.memory_space<vmem>>, vector<32x128xf32>
    %cst = arith.constant dense<0.000000e+00> : vector<8x128xf32>
    %3 = tpu.matmul %0, %2, %cst {dimension_numbers = #tpu.dot_dimension_numbers<[1], [0], [0], [1], [0, 0, 1, 1], [], []>} : vector<8x32xf32>, vector<32x128xf32>, vector<8x128xf32> -> vector<8x128xf32>
    %c0_5 = arith.constant 0 : index
    %c0_6 = arith.constant 0 : index
    %4 = vector.load %arg4[%c0_5, %c0_6] : memref<8x128xf32, #tpu.memory_space<vmem>>, vector<8x128xf32>
    %cst_7 = arith.constant dense<0.000000e+00> : vector<8x128xf32>
    %5 = tpu.matmul %1, %4, %cst_7 {dimension_numbers = #tpu.dot_dimension_numbers<[1], [0], [0], [1], [0, 0, 1, 1], [], []>} : vector<8x8xf32>, vector<8x128xf32>, vector<8x128xf32> -> vector<8x128xf32>
    %6 = vector.extract_strided_slice %3 {offsets = [0, 0], sizes = [8, 32], strides = [1, 1]} : vector<8x128xf32> to vector<8x32xf32>
    %7 = arith.mulf %0, %6 : vector<8x32xf32>
    %cst_8 = arith.constant dense<0.000000e+00> : vector<8xf32>
    %8 = vector.multi_reduction <add>, %7, %cst_8 [1] : vector<8x32xf32> to vector<8xf32>
    %9 = vector.shape_cast %8 : vector<8xf32> to vector<8x1xf32>
    %10 = vector.extract_strided_slice %5 {offsets = [0, 32], sizes = [8, 8], strides = [1, 1]} : vector<8x128xf32> to vector<8x8xf32>
    %11 = arith.mulf %1, %10 : vector<8x8xf32>
    %cst_9 = arith.constant dense<0.000000e+00> : vector<8xf32>
    %12 = vector.multi_reduction <add>, %11, %cst_9 [1] : vector<8x8xf32> to vector<8xf32>
    %13 = vector.shape_cast %12 : vector<8xf32> to vector<8x1xf32>
    %14 = arith.addf %9, %13 : vector<8x1xf32>
    %cst_10 = arith.constant 5.000000e-01 : f32
    %15 = vector.broadcast %cst_10 : f32 to vector<8x1xf32>
    %16 = arith.mulf %15, %14 : vector<8x1xf32>
    %17 = tpu.iota {dimensions = array<i32: 1>} : vector<8x128xi32>
    %18 = arith.addf %3, %5 : vector<8x128xf32>
    %c40_i32 = arith.constant 40 : i32
    %19 = vector.broadcast %c40_i32 : i32 to vector<8x128xi32>
    %20 = arith.cmpi eq, %17, %19 : vector<8x128xi32>
    %cst_11 = arith.constant 0.000000e+00 : f32
    %21 = vector.shape_cast %16 : vector<8x1xf32> to vector<8x1xf32>
    %22 = vector.broadcast %21 : vector<8x1xf32> to vector<8x128xf32>
    %23 = vector.broadcast %cst_11 : f32 to vector<8x128xf32>
    %24 = arith.select %20, %22, %23 : vector<8x128xi1>, vector<8x128xf32>
    %25 = arith.addf %18, %24 : vector<8x128xf32>
    %c0_12 = arith.constant 0 : index
    %c0_13 = arith.constant 0 : index
    %26 = vector.load %arg5[%c0_12, %c0_13] : memref<8x128xf32, #tpu.memory_space<vmem>>, vector<8x128xf32>
    tpu.vector_store %arg5[%c0_12, %c0_13], %25 {strides = array<i32>} : memref<8x128xf32, #tpu.memory_space<vmem>>, vector<8x128xf32>,
    return
  }
  func.func @transform_0(%arg0: i32) -> (i32, i32) {
    %c0_i32 = arith.constant 0 : i32
    %c0_i32_0 = arith.constant 0 : i32
    return %arg0, %c0_i32 : i32, i32
  }
  func.func @transform_1(%arg0: i32) -> (i32, i32) {
    %c0_i32 = arith.constant 0 : i32
    %c0_i32_0 = arith.constant 0 : i32
    return %arg0, %c0_i32 : i32, i32
  }
  func.func @transform_2(%arg0: i32) -> (i32, i32) {
    %c0_i32 = arith.constant 0 : i32
    %c0_i32_0 = arith.constant 0 : i32
    %c0_i32_1 = arith.constant 0 : i32
    return %c0_i32, %c0_i32_0 : i32, i32
  }
  func.func @transform_3(%arg0: i32) -> (i32, i32) {
    %c0_i32 = arith.constant 0 : i32
    %c0_i32_0 = arith.constant 0 : i32
    %c0_i32_1 = arith.constant 0 : i32
    return %c0_i32, %c0_i32_0 : i32, i32
  }
  func.func @transform_4(%arg0: i32) -> (i32, i32) {
    %c0_i32 = arith.constant 0 : i32
    %c0_i32_0 = arith.constant 0 : i32
    return %arg0, %c0_i32 : i32, i32
  }
}

</mosaic_0001>

<llo_original>
// kernel: tpu_custom_call.1
$region0: #{tpu_custom_call.1}
  #allocation0 [shape = 'u32[]', space=smem, size = 0x4, offset = 0x4, fixed_abs, tag = 'smem constant byte address 0x4 - core index']
  #allocation1 [shape = 'u32[144,128]{1,0:T(1,128)}', space=vmem, size = 0x12000, scoped, tag = 'internal scratch']
  %s0 = inlined_call_operand.hbm [shape: f32[8,32], index: 0, kind: input, shape index: {}]
  %s1 = inlined_call_operand.hbm [shape: f32[8,8], index: 1, kind: input, shape index: {}]
  %s2 = inlined_call_operand.hbm [shape: f32[32,128], index: 2, kind: input, shape index: {}]
  %s3 = inlined_call_operand.vmem [shape: f32[8,128], index: 3, kind: input, shape index: {}]
  %s4 = inlined_call_operand.hbm [shape: f32[8,128], index: 4, kind: output, shape index: {}]
  %s5 = sld [smem:[#allocation0]]
  $region38: #{tpu_custom_call.1} parent=0
    _
  %s7 = ssub.s32 1, %s5
  %s8 = scalar_select 0, %s7, %s5
  $region1: #{tpu_custom_call.1} parent=0
    #allocation2 [shape = 'u8[4096]{0}', space=vmem, size = 0x1000, scoped, tag = 'input window, operand 0, single buffered']
    #allocation3 [shape = 's32[1]{0}', space=sflag, size = 0x4, scoped, tag = 'scoped memory for tpu_custom_call.1']
    #allocation4 [shape = 's32[1]{0}', space=sflag, size = 0x4, scoped, tag = 'scoped memory for tpu_custom_call.1']
    #allocation5 [shape = 'u8[4096]{0}', space=vmem, size = 0x1000, scoped, tag = 'input window, operand 1, single buffered']
    #allocation6 [shape = 's32[1]{0}', space=sflag, size = 0x4, scoped, tag = 'scoped memory for tpu_custom_call.1']
    #allocation7 [shape = 'u8[16384]{0}', space=vmem, size = 0x4000, scoped, tag = 'input window, operand 2, single buffered']
    #allocation8 [shape = 'u8[4096]{0}', space=vmem, size = 0x1000, scoped, tag = 'output window, operand 0, single buffered']
    %9 = vsyncpa [#allocation3], 0
    %10 = vsyncpa [#allocation6], 0
    %11 = vsyncpa [#allocation4], 0
    // Predicated region
    $region2: #{tpu_custom_call.1} parent=1 // pred_check
      _
    $region3: #{tpu_custom_call.1} parent=1 // pred_check_branch
      %13 = sbr.rel (0) target = $region5
    $region4: #{tpu_custom_call.1} parent=1 // pred_region
      %s15 = ssub.s32 128, 128
      %16 = vsyncadd [#allocation3], %s15
      %s18 = sshll.u32 [#allocation2], 4
      %s19 = int_to_ptr.vmem [resolvable:$true] %s18
      %21 = dma.hbm_to_vmem [thread:$0]  %s0, 128, %s19, [#allocation3]
    $region5: #{tpu_custom_call.1} parent=1 // pred_fallthru
      _
    // Predicated region
    $region6: #{tpu_custom_call.1} parent=1 // pred_check
      _
    $region7: #{tpu_custom_call.1} parent=1 // pred_check_branch
      %23 = sbr.rel (0) target = $region9
    $region8: #{tpu_custom_call.1} parent=1 // pred_region
      %s25 = ssub.s32 128, 128
      %26 = vsyncadd [#allocation6], %s25
      %s28 = sshll.u32 [#allocation5], 4
      %s29 = int_to_ptr.vmem [resolvable:$true] %s28
      %31 = dma.hbm_to_vmem [thread:$0]  %s1, 128, %s29, [#allocation6]
    $region9: #{tpu_custom_call.1} parent=1 // pred_fallthru
      _
    // Predicated region
    $region10: #{tpu_custom_call.1} parent=1 // pred_check
      _
    $region11: #{tpu_custom_call.1} parent=1 // pred_check_branch
      %33 = sbr.rel (0) target = $region13
    $region12: #{tpu_custom_call.1} parent=1 // pred_region
      %s35 = ssub.s32 512, 512
      %36 = vsyncadd [#allocation6], %s35
      %s37 = sshll.u32 [#allocation7], 4
      %s38 = int_to_ptr.vmem [resolvable:$true] %s37
      %43 = dma.hbm_to_vmem [thread:$0]  %s2, 512, %s38, [#allocation6], 128, 128, 8
    $region13: #{tpu_custom_call.1} parent=1 // pred_fallthru
      _
    // Predicated region
    $region14: #{tpu_custom_call.1} parent=1 // pred_check
      _
    $region15: #{tpu_custom_call.1} parent=1 // pred_check_branch
      %45 = sbr.rel (0) target = $region17
    $region16: #{tpu_custom_call.1} parent=1 // pred_region
      _
    $region17: #{tpu_custom_call.1} parent=1 // pred_fallthru
      _
    // Predicated region
    $region18: #{tpu_custom_call.1} parent=1 // pred_check
      _
    $region19: #{tpu_custom_call.1} parent=1 // pred_check_branch
      %47 = sbr.rel (0) target = $region21
    $region20: #{tpu_custom_call.1} parent=1 // pred_region
      %48 = dma.done [#allocation3], 128
    $region21: #{tpu_custom_call.1} parent=1 // pred_fallthru
      _
    // Predicated region
    $region22: #{tpu_custom_call.1} parent=1 // pred_check
      _
    $region23: #{tpu_custom_call.1} parent=1 // pred_check_branch
      %50 = sbr.rel (0) target = $region25
    $region24: #{tpu_custom_call.1} parent=1 // pred_region
      %51 = dma.done [#allocation6], 128
    $region25: #{tpu_custom_call.1} parent=1 // pred_fallthru
      _
    // Predicated region
    $region26: #{tpu_custom_call.1} parent=1 // pred_check
      _
    $region27: #{tpu_custom_call.1} parent=1 // pred_check_branch
      %53 = sbr.rel (0) target = $region29
    $region28: #{tpu_custom_call.1} parent=1 // pred_region
      %54 = dma.done [#allocation6], 512
    $region29: #{tpu_custom_call.1} parent=1 // pred_fallthru
      _
    %v55 = vld [vmem:[#allocation2] sm:$0xff]
    %v56 = vld [vmem:[#allocation5] sm:$0xff]
    %v57 = vld [vmem:[#allocation7] sm:$0xff]
    %v58 = vld [vmem:[#allocation7 + $0x8] sm:$0xff]
    %v59 = vld [vmem:[#allocation7 + $0x10] sm:$0xff]
    %v60 = vld [vmem:[#allocation7 + $0x18] sm:$0xff]
    %vm61 = vcmask 261120
    %v63 = vsel %vm61, %v55, 0
    %65 = vmatprep.subr.mxu0 0.0
    %66 = vmatpush1.msra.mxu0 %v57
    %67 = vmatprep.subr.mxu0 0.0
    %68 = vmatpush1.msra.mxu0 %v58
    %69 = vmatprep.subr.mxu0 0.0
    %70 = vmatpush1.msra.mxu0 %v59
    %71 = vmatprep.subr.mxu0 0.0
    %72 = vmatpush1.msra.mxu0 %v60
    %73 = vmatprep.subr.mxu0 0.0
    %74 = vmatpush1.msra.mxu0 0.0
    %75 = vmatprep.subr.mxu0 0.0
    %76 = vmatpush1.msra.mxu0 0.0
    %77 = vmatprep.subr.mxu0 0.0
    %78 = vmatpush1.msra.mxu0 0.0
    %79 = vmatprep.subr.mxu0 0.0
    %80 = vmatpush1.msra.mxu0 0.0
    %81 = vmatprep.subr.mxu0 0.0
    %82 = vmatpush1.msra.mxu0 0.0
    %83 = vmatprep.subr.mxu0 0.0
    %84 = vmatpush1.msra.mxu0 0.0
    %85 = vmatprep.subr.mxu0 0.0
    %86 = vmatpush1.msra.mxu0 0.0
    %87 = vmatprep.subr.mxu0 0.0
    %88 = vmatpush1.msra.mxu0 0.0
    %89 = vmatprep.subr.mxu0 0.0
    %90 = vmatpush1.msra.mxu0 0.0
    %91 = vmatprep.subr.mxu0 0.0
    %92 = vmatpush1.msra.mxu0 0.0
    %93 = vmatprep.subr.mxu0 0.0
    %94 = vmatpush1.msra.mxu0 0.0
    %95 = vmatprep.subr.mxu0 0.0
    %96 = vmatpush1.msra.mxu0 0.0
    %97 = vmatprep.subr.mxu0 0.0
    %98 = vmatpush1.msra.mxu0 0.0
    %99 = vmatprep.subr.mxu0 0.0
    %100 = vmatpush1.msra.mxu0 0.0
    %101 = vmatprep.subr.mxu0 0.0
    %102 = vmatpush1.msra.mxu0 0.0
    %103 = vmatprep.subr.mxu0 0.0
    %104 = vmatpush1.msra.mxu0 0.0
    %105 = vmatprep.subr.mxu0 0.0
    %106 = vmatpush1.msra.mxu0 0.0
    %107 = vmatprep.subr.mxu0 0.0
    %108 = vmatpush1.msra.mxu0 0.0
    %109 = vmatprep.subr.mxu0 0.0
    %110 = vmatpush1.msra.mxu0 0.0
    %111 = vmatprep.subr.mxu0 0.0
    %112 = vmatpush1.msra.mxu0 0.0
    %113 = vmatprep.subr.mxu0 0.0
    %114 = vmatpush1.msra.mxu0 0.0
    %115 = vmatprep.subr.mxu0 0.0
    %116 = vmatpush1.msra.mxu0 0.0
    %117 = vmatprep.subr.mxu0 0.0
    %118 = vmatpush1.msra.mxu0 0.0
    %119 = vmatprep.subr.mxu0 0.0
    %120 = vmatpush1.msra.mxu0 0.0
    %121 = vmatprep.subr.mxu0 0.0
    %122 = vmatpush1.msra.mxu0 0.0
    %123 = vmatprep.subr.mxu0 0.0
    %124 = vmatpush1.msra.mxu0 0.0
    %125 = vmatprep.subr.mxu0 0.0
    %126 = vmatpush1.msra.mxu0 0.0
    %127 = vmatprep.subr.mxu0 0.0
    %128 = vmatpush1.msra.mxu0 0.0
    %129 = vmatprep.mubr.f32.mxu0 0.0
    %130 = vmatmul.mubr.f32.gmra.mrb[0].mxu0 %v63
    %v131 = vpop.f32.mrb[0].mxu0
    %v132 = vadd.f32 0.0, %v131
    %v133 = vpop.f32.mrb[0].mxu0
    %134 = vdwg.mxu0
    %v135 = vld [vmem:[%s3] sm:$0xff]
    %vm136 = vcmask 64512
    %v138 = vsel %vm136, %v56, 0
    %140 = vmatprep.subr.mxu0 0.0
    %141 = vmatpush1.msra.mxu0 %v135
    %142 = vmatprep.subr.mxu0 0.0
    %143 = vmatpush1.msra.mxu0 0.0
    %144 = vmatprep.subr.mxu0 0.0
    %145 = vmatpush1.msra.mxu0 0.0
    %146 = vmatprep.subr.mxu0 0.0
    %147 = vmatpush1.msra.mxu0 0.0
    %148 = vmatprep.subr.mxu0 0.0
    %149 = vmatpush1.msra.mxu0 0.0
    %150 = vmatprep.subr.mxu0 0.0
    %151 = vmatpush1.msra.mxu0 0.0
    %152 = vmatprep.subr.mxu0 0.0
    %153 = vmatpush1.msra.mxu0 0.0
    %154 = vmatprep.subr.mxu0 0.0
    %155 = vmatpush1.msra.mxu0 0.0
    %156 = vmatprep.subr.mxu0 0.0
    %157 = vmatpush1.msra.mxu0 0.0
    %158 = vmatprep.subr.mxu0 0.0
    %159 = vmatpush1.msra.mxu0 0.0
    %160 = vmatprep.subr.mxu0 0.0
    %161 = vmatpush1.msra.mxu0 0.0
    %162 = vmatprep.subr.mxu0 0.0
    %163 = vmatpush1.msra.mxu0 0.0
    %164 = vmatprep.subr.mxu0 0.0
    %165 = vmatpush1.msra.mxu0 0.0
    %166 = vmatprep.subr.mxu0 0.0
    %167 = vmatpush1.msra.mxu0 0.0
    %168 = vmatprep.subr.mxu0 0.0
    %169 = vmatpush1.msra.mxu0 0.0
    %170 = vmatprep.subr.mxu0 0.0
    %171 = vmatpush1.msra.mxu0 0.0
    %172 = vmatprep.subr.mxu0 0.0
    %173 = vmatpush1.msra.mxu0 0.0
    %174 = vmatprep.subr.mxu0 0.0
    %175 = vmatpush1.msra.mxu0 0.0
    %176 = vmatprep.subr.mxu0 0.0
    %177 = vmatpush1.msra.mxu0 0.0
    %178 = vmatprep.subr.mxu0 0.0
    %179 = vmatpush1.msra.mxu0 0.0
    %180 = vmatprep.subr.mxu0 0.0
    %181 = vmatpush1.msra.mxu0 0.0
    %182 = vmatprep.subr.mxu0 0.0
    %183 = vmatpush1.msra.mxu0 0.0
    %184 = vmatprep.subr.mxu0 0.0
    %185 = vmatpush1.msra.mxu0 0.0
    %186 = vmatprep.subr.mxu0 0.0
    %187 = vmatpush1.msra.mxu0 0.0
    %188 = vmatprep.subr.mxu0 0.0
    %189 = vmatpush1.msra.mxu0 0.0
    %190 = vmatprep.subr.mxu0 0.0
    %191 = vmatpush1.msra.mxu0 0.0
    %192 = vmatprep.subr.mxu0 0.0
    %193 = vmatpush1.msra.mxu0 0.0
    %194 = vmatprep.subr.mxu0 0.0
    %195 = vmatpush1.msra.mxu0 0.0
    %196 = vmatprep.subr.mxu0 0.0
    %197 = vmatpush1.msra.mxu0 0.0
    %198 = vmatprep.subr.mxu0 0.0
    %199 = vmatpush1.msra.mxu0 0.0
    %200 = vmatprep.subr.mxu0 0.0
    %201 = vmatpush1.msra.mxu0 0.0
    %202 = vmatprep.subr.mxu0 0.0
    %203 = vmatpush1.msra.mxu0 0.0
    %204 = vmatprep.mubr.f32.mxu0 0.0
    %205 = vmatmul.mubr.f32.gmra.mrb[0].mxu0 %v138
    %v206 = vpop.f32.mrb[0].mxu0
    %v207 = vadd.f32 0.0, %v206
    %v208 = vpop.f32.mrb[0].mxu0
    %209 = vdwg.mxu0
    %v210 = vmul.f32 %v55, %v132
    %v211 = vsel %vm61, %v210, 0.0
    %212 = vadd.xlane.f32.xlu0 %v211
    %v213 = vpop.xlane.xlu0 %212
    %215 = vrot.lane.b32.xlu0 %v207, 96
    %v216 = vpop.permute.xlu0 %215
    %v218 = vmul.f32 %v56, %v216
    %v219 = vsel %vm136, %v218, 0.0
    %220 = vadd.xlane.f32.xlu0 %v219
    %v221 = vpop.xlane.xlu0 %220
    %v222 = vadd.f32 %v213, %v221
    %v223 = vmul.f32 %v222, 0.5
    %v224 = vlaneseq
    %v225 = vand.u32 %v224, 127
    %v226 = vadd.f32 %v132, %v207
    %vm227 = vcmp.eq.s32.totalorder %v225, 40
    %v228 = vsel %vm227, %v223, 0.0
    %v229 = vadd.f32 %v226, %v228
    %230 = vst [vmem:[#allocation8] sm:$0xff] %v229
    // Predicated region
    $region30: #{tpu_custom_call.1} parent=1 // pred_check
      _
    $region31: #{tpu_custom_call.1} parent=1 // pred_check_branch
      %232 = sbr.rel (0) target = $region33
    $region32: #{tpu_custom_call.1} parent=1 // pred_region
      %s234 = ssub.s32 128, 128
      %235 = vsyncadd [#allocation4], %s234
      %s237 = sshll.u32 [#allocation8], 4
      %s238 = int_to_ptr.vmem [resolvable:$true] %s237
      %240 = dma.vmem_to_hbm [thread:$0]  %s238, 128, %s4, [#allocation4]
    $region33: #{tpu_custom_call.1} parent=1 // pred_fallthru
      _
    // Predicated region
    $region34: #{tpu_custom_call.1} parent=1 // pred_check
      _
    $region35: #{tpu_custom_call.1} parent=1 // pred_check_branch
      %242 = sbr.rel (0) target = $region37
    $region36: #{tpu_custom_call.1} parent=1 // pred_region
      %243 = dma.done [#allocation4], 128
    $region37: #{tpu_custom_call.1} parent=1 // pred_fallthru
      _
    %244 = vsyncpa [#allocation3], 1
    %245 = vsyncpa [#allocation6], 1
    %246 = vsyncpa [#allocation4], 1

</llo_original>
